<compile_context>
chip_gen: v7x
topology: tpu7x:2x2x1
jax: 0.10.0
libtpu: 0.0.40
codegen_flags: <defaults>
</compile_context>

<pallas_src>
import jax
import jax.numpy as jnp
from jax.experimental import pallas as pl
from jax.experimental.pallas import tpu as pltpu


def _masked_predict_kernel(u_ref, vt_ref, m_ref, o_ref):
    # u_ref:  [tb, E]   user-embedding tile
    # vt_ref: [E,  ti]  pre-transposed item-embedding tile (lane-dense rhs)
    # m_ref:  [tb, ti]  train-mask tile (any numeric dtype)
    # o_ref:  [tb, ti]  masked prediction tile
    preds = jax.lax.dot_general(
        u_ref[...],
        vt_ref[...],
        dimension_numbers=(((1,), (0,)), ((), ())),
        preferred_element_type=jnp.float32,
    )
    m = m_ref[...].astype(jnp.float32)
    # Exact _mask_predict semantics (also correct for non-binary masks):
    #   full_preds * (1 - train_mask) - 1e8 * train_mask
    o_ref[...] = (preds * (1.0 - m) - 1.0e8 * m).astype(o_ref.dtype)


def _round_up(x, m):
    return ((x + m - 1) // m) * m


def _fit_tile(dim, max_tile, mult):
    """Rebalance a tile to the extent (avoids a near-empty trailing block),
    rounded up to the hardware tiling multiple."""
    n_blocks = max(1, pl.cdiv(dim, max_tile))
    return _round_up(pl.cdiv(dim, n_blocks), mult)


def _vmem_bytes(tb, ti, e, u_dtype, v_dtype, m_dtype, o_dtype):
    bs = lambda d: jnp.dtype(d).itemsize
    tiles = (tb * e * bs(u_dtype) + e * ti * bs(v_dtype)
             + tb * ti * (bs(m_dtype) + bs(o_dtype)))
    # double-buffered pipeline buffers + one f32 matmul intermediate tile
    return 2 * tiles + tb * ti * 4


def full_predict(user_emb_batch, item_emb_t, train_mask, *,
                 tb=512, ti=2048, out_dtype=jnp.float32,
                 vmem_budget_bytes=36 * 1024 * 1024):
    """Masked all-rank predictions: (user_emb @ item_emb.T) fused with
    _mask_predict inside one Pallas kernel.

    user_emb_batch: [B, E]  embeddings of the test-batch users
    item_emb_t:     [E, I]  item embedding table, stored pre-transposed once
    train_mask:     [B, I]  training-pair mask (any numeric dtype)
    returns:        [B, I]  out_dtype scores, -1e8 at masked (training) pairs
    """
    B, E = user_emb_batch.shape
    E2, I = item_emb_t.shape
    assert E == E2, (user_emb_batch.shape, item_emb_t.shape)
    assert train_mask.shape == (B, I), train_mask.shape

    # Tiles rebalanced to the extents; sublane dim a multiple of 32 (covers
    # int8/bf16/f32 packing), lane dim a multiple of 128 (vreg lane width).
    tb = _fit_tile(B, tb, 32)
    ti = _fit_tile(I, ti, 128)

    # Shrink until the double-buffered footprint fits the per-core VMEM budget
    # (v7x has only 64 MiB per TensorCore; default budget leaves headroom).
    def footprint(tb_, ti_):
        return _vmem_bytes(tb_, ti_, E, user_emb_batch.dtype,
                           item_emb_t.dtype, train_mask.dtype, out_dtype)

    while footprint(tb, ti) > vmem_budget_bytes and (ti > 128 or tb > 32):
        if ti > 128 and (ti >= 2 * tb or tb <= 32):
            ti = max(128, _round_up(ti // 2, 128))
        else:
            tb = max(32, _round_up(tb // 2, 32))

    vmem_limit_bytes = int(min(max(footprint(tb, ti) + 12 * 1024 * 1024,
                                   32 * 1024 * 1024),
                               56 * 1024 * 1024))

    # Item axis OUTER (slow), batch axis INNER (fast): the large item tile
    # keeps the same block index across inner steps, so Pallas does not
    # re-DMA it -> the item table is streamed from HBM exactly once per core.
    grid = (pl.cdiv(I, ti), pl.cdiv(B, tb))

    return pl.pallas_call(
        _masked_predict_kernel,
        out_shape=jax.ShapeDtypeStruct((B, I), out_dtype),
        grid_spec=pltpu.PrefetchScalarGridSpec(
            num_scalar_prefetch=0,
            grid=grid,
            in_specs=[
                # user tile: varies with the inner (batch) axis only
                pl.BlockSpec((tb, E), lambda i, b: (b, 0)),
                # item tile: varies with the outer axis only -> stays resident
                pl.BlockSpec((E, ti), lambda i, b: (0, i)),
                # mask tile matches the output tile
                pl.BlockSpec((tb, ti), lambda i, b: (b, i)),
            ],
            out_specs=pl.BlockSpec((tb, ti), lambda i, b: (b, i)),
        ),
        compiler_params=pltpu.CompilerParams(
            # Outer (item) axis has many blocks -> megacore-sharded on v7x;
            # sequential inner batch axis keeps the item tile resident.
            dimension_semantics=("parallel", "arbitrary"),
            vmem_limit_bytes=vmem_limit_bytes,
        ),
    )(user_emb_batch, item_emb_t, train_mask)


if __name__ == "__main__":
    # configs-equivalent hyper-parameters (synthetic, small)
    user_num = 64
    item_num = 1000          # not a multiple of 128 -> exercises edge blocks
    embedding_size = 64
    test_batch = 40          # not a multiple of the batch tile either

    key = jax.random.PRNGKey(0)
    k_user, k_item, k_users, k_mask = jax.random.split(key, 4)

    # Deterministic synthetic "parameters" (what BaseModel.__init__ implies).
    user_table = jax.random.normal(
        k_user, (user_num, embedding_size), dtype=jnp.float32) * 0.1
    item_table = jax.random.normal(
        k_item, (item_num, embedding_size), dtype=jnp.float32) * 0.1

    # One-time parameter-layout prep: keep the item table pre-transposed
    # [E, I] so every full_predict call gets a lane-dense MXU rhs with zero
    # per-call conversion / layout passes.
    item_table_t = jnp.asarray(item_table.T)

    # batch_data: (batch_users, train_mask)
    batch_users = jax.random.randint(k_users, (test_batch,), 0, user_num)
    train_mask = jax.random.bernoulli(
        k_mask, p=0.1, shape=(test_batch, item_num)).astype(jnp.float32)

    # TODO(synk): fold the batch_users row gather into the kernel via
    # PrefetchScalarGridSpec(num_scalar_prefetch=1) + a per-row gather; for
    # now it stays one tiny [B, E] XLA gather (forward/cal_loss are abstract
    # `pass` in BaseModel).
    user_emb_batch = user_table[batch_users]

    # Pure-JAX f32 reference (the kernel now consumes f32 directly, so we
    # compare against the un-rounded PyTorch-equivalent scores).
    ref = jnp.dot(user_emb_batch, item_table_t,
                  precision=jax.lax.Precision.HIGHEST)
    ref = ref * (1.0 - train_mask) - 1.0e8 * train_mask

    # Default (production-sized) tiles — rebalanced/clamped to these extents.
    preds = full_predict(user_emb_batch, item_table_t, train_mask)
    preds = jax.block_until_ready(preds)
    assert preds.shape == (test_batch, item_num)
    assert preds.dtype == jnp.float32
    assert jnp.allclose(preds, ref, atol=1e-2, rtol=1e-2)

    # Small explicit tiles — exercises the multi-block grid, the resident item
    # tile across inner batch steps, and edge-block clipping on both axes
    # (no wrapper pad / output slice anywhere).
    preds_tiled = full_predict(user_emb_batch, item_table_t, train_mask,
                               tb=32, ti=256)
    preds_tiled = jax.block_until_ready(preds_tiled)
    assert jnp.allclose(preds_tiled, ref, atol=1e-2, rtol=1e-2)

    print("KERNEL_OK")
</pallas_src>

<mosaic_0001>
module attributes {stable_mosaic.version = 11 : i64} {
  func.func @_masked_predict_kernel(%arg0: i32, %arg1: i32, %arg2: memref<64x64xf32, #tpu.memory_space<vmem>>, %arg3: memref<64x1024xf32, #tpu.memory_space<vmem>>, %arg4: memref<64x1024xf32, #tpu.memory_space<vmem>>, %arg5: memref<64x1024xf32, #tpu.memory_space<vmem>>) attributes {dimension_semantics = [#tpu.dimension_semantics<parallel>, #tpu.dimension_semantics<arbitrary>], iteration_bounds = array<i64: 1, 1>, scalar_prefetch = 0 : i64, scratch_operands = 0 : i64, tpu.core_type = #tpu.core_type<tc>, window_params = [{transform_indices = @transform_0, window_bounds = array<i64: 64, 64>}, {transform_indices = @transform_1, window_bounds = array<i64: 64, 1024>}, {transform_indices = @transform_2, window_bounds = array<i64: 64, 1024>}, {transform_indices = @transform_3, window_bounds = array<i64: 64, 1024>}]} {
    %c0 = arith.constant 0 : index
    %c0_0 = arith.constant 0 : index
    %0 = vector.load %arg2[%c0, %c0_0] : memref<64x64xf32, #tpu.memory_space<vmem>>, vector<64x64xf32>
    %c0_1 = arith.constant 0 : index
    %c0_2 = arith.constant 0 : index
    %1 = vector.load %arg3[%c0_1, %c0_2] : memref<64x1024xf32, #tpu.memory_space<vmem>>, vector<64x1024xf32>
    %cst = arith.constant dense<0.000000e+00> : vector<64x1024xf32>
    %2 = tpu.matmul %0, %1, %cst {dimension_numbers = #tpu.dot_dimension_numbers<[1], [0], [0], [1], [0, 0, 1, 1], [], []>} : vector<64x64xf32>, vector<64x1024xf32>, vector<64x1024xf32> -> vector<64x1024xf32>
    %c0_3 = arith.constant 0 : index
    %c0_4 = arith.constant 0 : index
    %3 = vector.load %arg4[%c0_3, %c0_4] : memref<64x1024xf32, #tpu.memory_space<vmem>>, vector<64x1024xf32>
    %cst_5 = arith.constant 1.000000e+00 : f32
    %4 = vector.broadcast %cst_5 : f32 to vector<64x1024xf32>
    %5 = arith.subf %4, %3 : vector<64x1024xf32>
    %6 = arith.mulf %2, %5 : vector<64x1024xf32>
    %cst_6 = arith.constant 1.000000e+08 : f32
    %7 = vector.broadcast %cst_6 : f32 to vector<64x1024xf32>
    %8 = arith.mulf %7, %3 : vector<64x1024xf32>
    %9 = arith.subf %6, %8 : vector<64x1024xf32>
    %c0_7 = arith.constant 0 : index
    %c0_8 = arith.constant 0 : index
    %10 = vector.load %arg5[%c0_7, %c0_8] : memref<64x1024xf32, #tpu.memory_space<vmem>>, vector<64x1024xf32>
    tpu.vector_store %arg5[%c0_7, %c0_8], %9 {strides = array<i32>} : memref<64x1024xf32, #tpu.memory_space<vmem>>, vector<64x1024xf32>,
    return
  }
  func.func @transform_0(%arg0: i32, %arg1: i32) -> (i32, i32) {
    %c0_i32 = arith.constant 0 : i32
    %c0_i32_0 = arith.constant 0 : i32
    return %arg1, %c0_i32 : i32, i32
  }
  func.func @transform_1(%arg0: i32, %arg1: i32) -> (i32, i32) {
    %c0_i32 = arith.constant 0 : i32
    %c0_i32_0 = arith.constant 0 : i32
    return %c0_i32, %arg0 : i32, i32
  }
  func.func @transform_2(%arg0: i32, %arg1: i32) -> (i32, i32) {
    %c0_i32 = arith.constant 0 : i32
    return %arg1, %arg0 : i32, i32
  }
  func.func @transform_3(%arg0: i32, %arg1: i32) -> (i32, i32) {
    %c0_i32 = arith.constant 0 : i32
    return %arg1, %arg0 : i32, i32
  }
}

</mosaic_0001>

<llo_original>
// kernel: tpu_custom_call.1
$region0: #{tpu_custom_call.1}
  #allocation0 [shape = 'u32[]', space=smem, size = 0x4, offset = 0x4, fixed_abs, tag = 'smem constant byte address 0x4 - core index']
  #allocation1 [shape = 'u32[144,128]{1,0:T(1,128)}', space=vmem, size = 0x12000, scoped, tag = 'internal scratch']
  %s0 = inlined_call_operand.hbm [shape: f32[40,64], index: 0, kind: input, shape index: {}]
  %s1 = inlined_call_operand.hbm [shape: f32[64,1000], index: 1, kind: input, shape index: {}]
  %s2 = inlined_call_operand.hbm [shape: f32[40,1000], index: 2, kind: input, shape index: {}]
  %s3 = inlined_call_operand.hbm [shape: f32[40,1000], index: 3, kind: output, shape index: {}]
  %s4 = sld [smem:[#allocation0]]
  $region34: #{tpu_custom_call.1} parent=0
    _
  %s6 = ssub.s32 1, %s4
  %s7 = scalar_select 0, %s6, %s4
  $region1: #{tpu_custom_call.1} parent=0
    #allocation2 [shape = 'u8[32768]{0}', space=vmem, size = 0x8000, scoped, tag = 'input window, operand 0, single buffered']
    #allocation3 [shape = 's32[1]{0}', space=sflag, size = 0x4, scoped, tag = 'scoped memory for tpu_custom_call.1']
    #allocation4 [shape = 's32[1]{0}', space=sflag, size = 0x4, scoped, tag = 'scoped memory for tpu_custom_call.1']
    #allocation5 [shape = 'u8[262144]{0}', space=vmem, size = 0x40000, scoped, tag = 'input window, operand 1, single buffered']
    #allocation6 [shape = 's32[1]{0}', space=sflag, size = 0x4, scoped, tag = 'scoped memory for tpu_custom_call.1']
    #allocation7 [shape = 'u8[262144]{0}', space=vmem, size = 0x40000, scoped, tag = 'input window, operand 2, single buffered']
    #allocation8 [shape = 'u8[262144]{0}', space=vmem, size = 0x40000, scoped, tag = 'output window, operand 0, single buffered']
    %8 = vsyncpa [#allocation3], 0
    %9 = vsyncpa [#allocation6], 0
    %10 = vsyncpa [#allocation4], 0
    // Predicated region
    $region2: #{tpu_custom_call.1} parent=1 // pred_check
      _
    $region3: #{tpu_custom_call.1} parent=1 // pred_check_branch
      %12 = sbr.rel (0) target = $region5
    $region4: #{tpu_custom_call.1} parent=1 // pred_region
      %s14 = ssub.s32 1024, 640
      %15 = vsyncadd [#allocation3], %s14
      %s16 = sshll.u32 [#allocation2], 4
      %s17 = int_to_ptr.vmem [resolvable:$true] %s16
      %22 = dma.hbm_to_vmem [thread:$0]  %s0, 640, %s17, [#allocation3], 128, 128, 8
    $region5: #{tpu_custom_call.1} parent=1 // pred_fallthru
      _
    // Predicated region
    $region6: #{tpu_custom_call.1} parent=1 // pred_check
      _
    $region7: #{tpu_custom_call.1} parent=1 // pred_check_branch
      %24 = sbr.rel (0) target = $region9
    $region8: #{tpu_custom_call.1} parent=1 // pred_region
      %s26 = ssub.s32 8192, 8192
      %27 = vsyncadd [#allocation6], %s26
      %s28 = sshll.u32 [#allocation5], 4
      %s29 = int_to_ptr.vmem [resolvable:$true] %s28
      %34 = dma.hbm_to_vmem [thread:$0]  %s1, 8192, %s29, [#allocation6], 1024, 1024, 64
    $region9: #{tpu_custom_call.1} parent=1 // pred_fallthru
      _
    // Predicated region
    $region10: #{tpu_custom_call.1} parent=1 // pred_check
      _
    $region11: #{tpu_custom_call.1} parent=1 // pred_check_branch
      %36 = sbr.rel (0) target = $region13
    $region12: #{tpu_custom_call.1} parent=1 // pred_region
      %s38 = ssub.s32 8192, 5120
      %39 = vsyncadd [#allocation6], %s38
      %s40 = sshll.u32 [#allocation7], 4
      %s41 = int_to_ptr.vmem [resolvable:$true] %s40
      %46 = dma.hbm_to_vmem [thread:$0]  %s2, 5120, %s41, [#allocation6], 1024, 1024, 64
    $region13: #{tpu_custom_call.1} parent=1 // pred_fallthru
      _
    // Predicated region
    $region14: #{tpu_custom_call.1} parent=1 // pred_check
      _
    $region15: #{tpu_custom_call.1} parent=1 // pred_check_branch
      %48 = sbr.rel (0) target = $region17
    $region16: #{tpu_custom_call.1} parent=1 // pred_region
      %49 = dma.done [#allocation3], 1024
    $region17: #{tpu_custom_call.1} parent=1 // pred_fallthru
      _
    // Predicated region
    $region18: #{tpu_custom_call.1} parent=1 // pred_check
      _
    $region19: #{tpu_custom_call.1} parent=1 // pred_check_branch
      %51 = sbr.rel (0) target = $region21
    $region20: #{tpu_custom_call.1} parent=1 // pred_region
      %52 = dma.done [#allocation6], 8192
    $region21: #{tpu_custom_call.1} parent=1 // pred_fallthru
      _
    // Predicated region
    $region22: #{tpu_custom_call.1} parent=1 // pred_check
      _
    $region23: #{tpu_custom_call.1} parent=1 // pred_check_branch
      %54 = sbr.rel (0) target = $region25
    $region24: #{tpu_custom_call.1} parent=1 // pred_region
      %55 = dma.done [#allocation6], 8192
    $region25: #{tpu_custom_call.1} parent=1 // pred_fallthru
      _
    %v56 = vld [vmem:[#allocation2] sm:$0xff]
    %v57 = vld [vmem:[#allocation2 + $0x8] sm:$0xff]
    %v58 = vld [vmem:[#allocation2 + $0x10] sm:$0xff]
    %v59 = vld [vmem:[#allocation2 + $0x18] sm:$0xff]
    %v60 = vld [vmem:[#allocation2 + $0x20] sm:$0xff]
    %v61 = vld [vmem:[#allocation2 + $0x28] sm:$0xff]
    %v62 = vld [vmem:[#allocation2 + $0x30] sm:$0xff]
    %v63 = vld [vmem:[#allocation2 + $0x38] sm:$0xff]
    %v64 = vld [vmem:[#allocation5] sm:$0xff]
    %v65 = vld [vmem:[#allocation5 + $0x8] sm:$0xff]
    %v66 = vld [vmem:[#allocation5 + $0x10] sm:$0xff]
    %v67 = vld [vmem:[#allocation5 + $0x18] sm:$0xff]
    %v68 = vld [vmem:[#allocation5 + $0x20] sm:$0xff]
    %v69 = vld [vmem:[#allocation5 + $0x28] sm:$0xff]
    %v70 = vld [vmem:[#allocation5 + $0x30] sm:$0xff]
    %v71 = vld [vmem:[#allocation5 + $0x38] sm:$0xff]
    %v72 = vld [vmem:[#allocation5 + $0x40] sm:$0xff]
    %v73 = vld [vmem:[#allocation5 + $0x48] sm:$0xff]
    %v74 = vld [vmem:[#allocation5 + $0x50] sm:$0xff]
    %v75 = vld [vmem:[#allocation5 + $0x58] sm:$0xff]
    %v76 = vld [vmem:[#allocation5 + $0x60] sm:$0xff]
    %v77 = vld [vmem:[#allocation5 + $0x68] sm:$0xff]
    %v78 = vld [vmem:[#allocation5 + $0x70] sm:$0xff]
    %v79 = vld [vmem:[#allocation5 + $0x78] sm:$0xff]
    %v80 = vld [vmem:[#allocation5 + $0x80] sm:$0xff]
    %v81 = vld [vmem:[#allocation5 + $0x88] sm:$0xff]
    %v82 = vld [vmem:[#allocation5 + $0x90] sm:$0xff]
    %v83 = vld [vmem:[#allocation5 + $0x98] sm:$0xff]
    %v84 = vld [vmem:[#allocation5 + $0xa0] sm:$0xff]
    %v85 = vld [vmem:[#allocation5 + $0xa8] sm:$0xff]
    %v86 = vld [vmem:[#allocation5 + $0xb0] sm:$0xff]
    %v87 = vld [vmem:[#allocation5 + $0xb8] sm:$0xff]
    %v88 = vld [vmem:[#allocation5 + $0xc0] sm:$0xff]
    %v89 = vld [vmem:[#allocation5 + $0xc8] sm:$0xff]
    %v90 = vld [vmem:[#allocation5 + $0xd0] sm:$0xff]
    %v91 = vld [vmem:[#allocation5 + $0xd8] sm:$0xff]
    %v92 = vld [vmem:[#allocation5 + $0xe0] sm:$0xff]
    %v93 = vld [vmem:[#allocation5 + $0xe8] sm:$0xff]
    %v94 = vld [vmem:[#allocation5 + $0xf0] sm:$0xff]
    %v95 = vld [vmem:[#allocation5 + $0xf8] sm:$0xff]
    %v96 = vld [vmem:[#allocation5 + $0x100] sm:$0xff]
    %v97 = vld [vmem:[#allocation5 + $0x108] sm:$0xff]
    %v98 = vld [vmem:[#allocation5 + $0x110] sm:$0xff]
    %v99 = vld [vmem:[#allocation5 + $0x118] sm:$0xff]
    %v100 = vld [vmem:[#allocation5 + $0x120] sm:$0xff]
    %v101 = vld [vmem:[#allocation5 + $0x128] sm:$0xff]
    %v102 = vld [vmem:[#allocation5 + $0x130] sm:$0xff]
    %v103 = vld [vmem:[#allocation5 + $0x138] sm:$0xff]
    %v104 = vld [vmem:[#allocation5 + $0x140] sm:$0xff]
    %v105 = vld [vmem:[#allocation5 + $0x148] sm:$0xff]
    %v106 = vld [vmem:[#allocation5 + $0x150] sm:$0xff]
    %v107 = vld [vmem:[#allocation5 + $0x158] sm:$0xff]
    %v108 = vld [vmem:[#allocation5 + $0x160] sm:$0xff]
    %v109 = vld [vmem:[#allocation5 + $0x168] sm:$0xff]
    %v110 = vld [vmem:[#allocation5 + $0x170] sm:$0xff]
    %v111 = vld [vmem:[#allocation5 + $0x178] sm:$0xff]
    %v112 = vld [vmem:[#allocation5 + $0x180] sm:$0xff]
    %v113 = vld [vmem:[#allocation5 + $0x188] sm:$0xff]
    %v114 = vld [vmem:[#allocation5 + $0x190] sm:$0xff]
    %v115 = vld [vmem:[#allocation5 + $0x198] sm:$0xff]
    %v116 = vld [vmem:[#allocation5 + $0x1a0] sm:$0xff]
    %v117 = vld [vmem:[#allocation5 + $0x1a8] sm:$0xff]
    %v118 = vld [vmem:[#allocation5 + $0x1b0] sm:$0xff]
    %v119 = vld [vmem:[#allocation5 + $0x1b8] sm:$0xff]
    %v120 = vld [vmem:[#allocation5 + $0x1c0] sm:$0xff]
    %v121 = vld [vmem:[#allocation5 + $0x1c8] sm:$0xff]
    %v122 = vld [vmem:[#allocation5 + $0x1d0] sm:$0xff]
    %v123 = vld [vmem:[#allocation5 + $0x1d8] sm:$0xff]
    %v124 = vld [vmem:[#allocation5 + $0x1e0] sm:$0xff]
    %v125 = vld [vmem:[#allocation5 + $0x1e8] sm:$0xff]
    %v126 = vld [vmem:[#allocation5 + $0x1f0] sm:$0xff]
    %v127 = vld [vmem:[#allocation5 + $0x1f8] sm:$0xff]
    %vm128 = vcmask 523264
    %v130 = vsel %vm128, %v56, 0
    %v133 = vsel %vm128, %v57, 0
    %v136 = vsel %vm128, %v58, 0
    %v139 = vsel %vm128, %v59, 0
    %v142 = vsel %vm128, %v60, 0
    %v145 = vsel %vm128, %v61, 0
    %v148 = vsel %vm128, %v62, 0
    %v151 = vsel %vm128, %v63, 0
    %153 = vmatprep.subr.mxu0 %v65
    %154 = vmatpush1.msra.mxu0 %v64
    %155 = vmatprep.subr.mxu0 %v73
    %156 = vmatpush1.msra.mxu0 %v72
    %157 = vmatprep.subr.mxu0 %v81
    %158 = vmatpush1.msra.mxu0 %v80
    %159 = vmatprep.subr.mxu0 %v89
    %160 = vmatpush1.msra.mxu0 %v88
    %161 = vmatprep.subr.mxu0 %v97
    %162 = vmatpush1.msra.mxu0 %v96
    %163 = vmatprep.subr.mxu0 %v105
    %164 = vmatpush1.msra.mxu0 %v104
    %165 = vmatprep.subr.mxu0 %v113
    %166 = vmatpush1.msra.mxu0 %v112
    %167 = vmatprep.subr.mxu0 %v121
    %168 = vmatpush1.msra.mxu0 %v120
    %169 = vmatprep.subr.mxu0 0.0
    %170 = vmatpush1.msra.mxu0 0.0
    %171 = vmatprep.subr.mxu0 0.0
    %172 = vmatpush1.msra.mxu0 0.0
    %173 = vmatprep.subr.mxu0 0.0
    %174 = vmatpush1.msra.mxu0 0.0
    %175 = vmatprep.subr.mxu0 0.0
    %176 = vmatpush1.msra.mxu0 0.0
    %177 = vmatprep.subr.mxu0 0.0
    %178 = vmatpush1.msra.mxu0 0.0
    %179 = vmatprep.subr.mxu0 0.0
    %180 = vmatpush1.msra.mxu0 0.0
    %181 = vmatprep.subr.mxu0 0.0
    %182 = vmatpush1.msra.mxu0 0.0
    %183 = vmatprep.subr.mxu0 0.0
    %184 = vmatpush1.msra.mxu0 0.0
    %185 = vmatprep.subr.mxu0 0.0
    %186 = vmatpush1.msra.mxu0 0.0
    %187 = vmatprep.subr.mxu0 0.0
    %188 = vmatpush1.msra.mxu0 0.0
    %189 = vmatprep.subr.mxu0 0.0
    %190 = vmatpush1.msra.mxu0 0.0
    %191 = vmatprep.subr.mxu0 0.0
    %192 = vmatpush1.msra.mxu0 0.0
    %193 = vmatprep.subr.mxu0 0.0
    %194 = vmatpush1.msra.mxu0 0.0
    %195 = vmatprep.subr.mxu0 0.0
    %196 = vmatpush1.msra.mxu0 0.0
    %197 = vmatprep.subr.mxu0 0.0
    %198 = vmatpush1.msra.mxu0 0.0
    %199 = vmatprep.subr.mxu0 0.0
    %200 = vmatpush1.msra.mxu0 0.0
    %201 = vmatprep.subr.mxu0 0.0
    %202 = vmatpush1.msra.mxu0 0.0
    %203 = vmatprep.subr.mxu0 0.0
    %204 = vmatpush1.msra.mxu0 0.0
    %205 = vmatprep.subr.mxu0 0.0
    %206 = vmatpush1.msra.mxu0 0.0
    %207 = vmatprep.subr.mxu0 0.0
    %208 = vmatpush1.msra.mxu0 0.0
    %209 = vmatprep.subr.mxu0 0.0
    %210 = vmatpush1.msra.mxu0 0.0
    %211 = vmatprep.subr.mxu0 0.0
    %212 = vmatpush1.msra.mxu0 0.0
    %213 = vmatprep.subr.mxu0 0.0
    %214 = vmatpush1.msra.mxu0 0.0
    %215 = vmatprep.subr.mxu0 0.0
    %216 = vmatpush1.msra.mxu0 0.0
    %217 = vmatprep.mubr.f32.mxu0 0.0
    %218 = vmatmul.mubr.f32.gmra.mrb[0].mxu0 %v130
    %v219 = vpop.f32.mrb[0].mxu0
    %v220 = vadd.f32 0.0, %v219
    %v221 = vpop.f32.mrb[0].mxu0
    %v222 = vadd.f32 0.0, %v221
    %223 = vmatprep.mubr.f32.mxu0 0.0
    %224 = vmatmul.mubr.f32.gmra.mrb[0].mxu0 %v133
    %v225 = vpop.f32.mrb[0].mxu0
    %v226 = vadd.f32 0.0, %v225
    %v227 = vpop.f32.mrb[0].mxu0
    %v228 = vadd.f32 0.0, %v227
    %229 = vmatprep.mubr.f32.mxu0 0.0
    %230 = vmatmul.mubr.f32.gmra.mrb[0].mxu0 %v136
    %v231 = vpop.f32.mrb[0].mxu0
    %v232 = vadd.f32 0.0, %v231
    %v233 = vpop.f32.mrb[0].mxu0
    %v234 = vadd.f32 0.0, %v233
    %235 = vmatprep.mubr.f32.mxu0 0.0
    %236 = vmatmul.mubr.f32.gmra.mrb[0].mxu0 %v139
    %v237 = vpop.f32.mrb[0].mxu0
    %v238 = vadd.f32 0.0, %v237
    %v239 = vpop.f32.mrb[0].mxu0
    %v240 = vadd.f32 0.0, %v239
    %241 = vmatprep.mubr.f32.mxu0 0.0
    %242 = vmatmul.mubr.f32.gmra.mrb[0].mxu0 %v142
    %v243 = vpop.f32.mrb[0].mxu0
    %v244 = vadd.f32 0.0, %v243
    %v245 = vpop.f32.mrb[0].mxu0
    %v246 = vadd.f32 0.0, %v245
    %247 = vmatprep.mubr.f32.mxu0 0.0
    %248 = vmatmul.mubr.f32.gmra.mrb[0].mxu0 %v145
    %v249 = vpop.f32.mrb[0].mxu0
    %v250 = vadd.f32 0.0, %v249
    %v251 = vpop.f32.mrb[0].mxu0
    %v252 = vadd.f32 0.0, %v251
    %253 = vmatprep.mubr.f32.mxu0 0.0
    %254 = vmatmul.mubr.f32.gmra.mrb[0].mxu0 %v148
    %v255 = vpop.f32.mrb[0].mxu0
    %v256 = vadd.f32 0.0, %v255
    %v257 = vpop.f32.mrb[0].mxu0
    %v258 = vadd.f32 0.0, %v257
    %259 = vmatprep.mubr.f32.mxu0 0.0
    %260 = vmatmul.mubr.f32.gmra.mrb[0].mxu0 %v151
    %v261 = vpop.f32.mrb[0].mxu0
    %v262 = vadd.f32 0.0, %v261
    %v263 = vpop.f32.mrb[0].mxu0
    %v264 = vadd.f32 0.0, %v263
    %265 = vdwg.mxu0
    %266 = vmatprep.subr.mxu0 %v67
    %267 = vmatpush1.msra.mxu0 %v66
    %268 = vmatprep.subr.mxu0 %v75
    %269 = vmatpush1.msra.mxu0 %v74
    %270 = vmatprep.subr.mxu0 %v83
    %271 = vmatpush1.msra.mxu0 %v82
    %272 = vmatprep.subr.mxu0 %v91
    %273 = vmatpush1.msra.mxu0 %v90
    %274 = vmatprep.subr.mxu0 %v99
    %275 = vmatpush1.msra.mxu0 %v98
    %276 = vmatprep.subr.mxu0 %v107
    %277 = vmatpush1.msra.mxu0 %v106
    %278 = vmatprep.subr.mxu0 %v115
    %279 = vmatpush1.msra.mxu0 %v114
    %280 = vmatprep.subr.mxu0 %v123
    %281 = vmatpush1.msra.mxu0 %v122
    %282 = vmatprep.subr.mxu0 0.0
    %283 = vmatpush1.msra.mxu0 0.0
    %284 = vmatprep.subr.mxu0 0.0
    %285 = vmatpush1.msra.mxu0 0.0
    %286 = vmatprep.subr.mxu0 0.0
    %287 = vmatpush1.msra.mxu0 0.0
    %288 = vmatprep.subr.mxu0 0.0
    %289 = vmatpush1.msra.mxu0 0.0
    %290 = vmatprep.subr.mxu0 0.0
    %291 = vmatpush1.msra.mxu0 0.0
    %292 = vmatprep.subr.mxu0 0.0
    %293 = vmatpush1.msra.mxu0 0.0
    %294 = vmatprep.subr.mxu0 0.0
    %295 = vmatpush1.msra.mxu0 0.0
    %296 = vmatprep.subr.mxu0 0.0
    %297 = vmatpush1.msra.mxu0 0.0
    %298 = vmatprep.subr.mxu0 0.0
    %299 = vmatpush1.msra.mxu0 0.0
    %300 = vmatprep.subr.mxu0 0.0
    %301 = vmatpush1.msra.mxu0 0.0
    %302 = vmatprep.subr.mxu0 0.0
    %303 = vmatpush1.msra.mxu0 0.0
    %304 = vmatprep.subr.mxu0 0.0
    %305 = vmatpush1.msra.mxu0 0.0
    %306 = vmatprep.subr.mxu0 0.0
    %307 = vmatpush1.msra.mxu0 0.0
    %308 = vmatprep.subr.mxu0 0.0
    %309 = vmatpush1.msra.mxu0 0.0
    %310 = vmatprep.subr.mxu0 0.0
    %311 = vmatpush1.msra.mxu0 0.0
    %312 = vmatprep.subr.mxu0 0.0
    %313 = vmatpush1.msra.mxu0 0.0
    %314 = vmatprep.subr.mxu0 0.0
    %315 = vmatpush1.msra.mxu0 0.0
    %316 = vmatprep.subr.mxu0 0.0
    %317 = vmatpush1.msra.mxu0 0.0
    %318 = vmatprep.subr.mxu0 0.0
    %319 = vmatpush1.msra.mxu0 0.0
    %320 = vmatprep.subr.mxu0 0.0
    %321 = vmatpush1.msra.mxu0 0.0
    %322 = vmatprep.subr.mxu0 0.0
    %323 = vmatpush1.msra.mxu0 0.0
    %324 = vmatprep.subr.mxu0 0.0
    %325 = vmatpush1.msra.mxu0 0.0
    %326 = vmatprep.subr.mxu0 0.0
    %327 = vmatpush1.msra.mxu0 0.0
    %328 = vmatprep.subr.mxu0 0.0
    %329 = vmatpush1.msra.mxu0 0.0
    %330 = vmatprep.mubr.f32.mxu0 0.0
    %331 = vmatmul.mubr.f32.gmra.mrb[0].mxu0 %v130
    %v332 = vpop.f32.mrb[0].mxu0
    %v333 = vadd.f32 0.0, %v332
    %v334 = vpop.f32.mrb[0].mxu0
    %v335 = vadd.f32 0.0, %v334
    %336 = vmatprep.mubr.f32.mxu0 0.0
    %337 = vmatmul.mubr.f32.gmra.mrb[0].mxu0 %v133
    %v338 = vpop.f32.mrb[0].mxu0
    %v339 = vadd.f32 0.0, %v338
    %v340 = vpop.f32.mrb[0].mxu0
    %v341 = vadd.f32 0.0, %v340
    %342 = vmatprep.mubr.f32.mxu0 0.0
    %343 = vmatmul.mubr.f32.gmra.mrb[0].mxu0 %v136
    %v344 = vpop.f32.mrb[0].mxu0
    %v345 = vadd.f32 0.0, %v344
    %v346 = vpop.f32.mrb[0].mxu0
    %v347 = vadd.f32 0.0, %v346
    %348 = vmatprep.mubr.f32.mxu0 0.0
    %349 = vmatmul.mubr.f32.gmra.mrb[0].mxu0 %v139
    %v350 = vpop.f32.mrb[0].mxu0
    %v351 = vadd.f32 0.0, %v350
    %v352 = vpop.f32.mrb[0].mxu0
    %v353 = vadd.f32 0.0, %v352
    %354 = vmatprep.mubr.f32.mxu0 0.0
    %355 = vmatmul.mubr.f32.gmra.mrb[0].mxu0 %v142
    %v356 = vpop.f32.mrb[0].mxu0
    %v357 = vadd.f32 0.0, %v356
    %v358 = vpop.f32.mrb[0].mxu0
    %v359 = vadd.f32 0.0, %v358
    %360 = vmatprep.mubr.f32.mxu0 0.0
    %361 = vmatmul.mubr.f32.gmra.mrb[0].mxu0 %v145
    %v362 = vpop.f32.mrb[0].mxu0
    %v363 = vadd.f32 0.0, %v362
    %v364 = vpop.f32.mrb[0].mxu0
    %v365 = vadd.f32 0.0, %v364
    %366 = vmatprep.mubr.f32.mxu0 0.0
    %367 = vmatmul.mubr.f32.gmra.mrb[0].mxu0 %v148
    %v368 = vpop.f32.mrb[0].mxu0
    %v369 = vadd.f32 0.0, %v368
    %v370 = vpop.f32.mrb[0].mxu0
    %v371 = vadd.f32 0.0, %v370
    %372 = vmatprep.mubr.f32.mxu0 0.0
    %373 = vmatmul.mubr.f32.gmra.mrb[0].mxu0 %v151
    %v374 = vpop.f32.mrb[0].mxu0
    %v375 = vadd.f32 0.0, %v374
    %v376 = vpop.f32.mrb[0].mxu0
    %v377 = vadd.f32 0.0, %v376
    %378 = vdwg.mxu0
    %379 = vmatprep.subr.mxu0 %v69
    %380 = vmatpush1.msra.mxu0 %v68
    %381 = vmatprep.subr.mxu0 %v77
    %382 = vmatpush1.msra.mxu0 %v76
    %383 = vmatprep.subr.mxu0 %v85
    %384 = vmatpush1.msra.mxu0 %v84
    %385 = vmatprep.subr.mxu0 %v93
    %386 = vmatpush1.msra.mxu0 %v92
    %387 = vmatprep.subr.mxu0 %v101
    %388 = vmatpush1.msra.mxu0 %v100
    %389 = vmatprep.subr.mxu0 %v109
    %390 = vmatpush1.msra.mxu0 %v108
    %391 = vmatprep.subr.mxu0 %v117
    %392 = vmatpush1.msra.mxu0 %v116
    %393 = vmatprep.subr.mxu0 %v125
    %394 = vmatpush1.msra.mxu0 %v124
    %395 = vmatprep.subr.mxu0 0.0
    %396 = vmatpush1.msra.mxu0 0.0
    %397 = vmatprep.subr.mxu0 0.0
    %398 = vmatpush1.msra.mxu0 0.0
    %399 = vmatprep.subr.mxu0 0.0
    %400 = vmatpush1.msra.mxu0 0.0
    %401 = vmatprep.subr.mxu0 0.0
    %402 = vmatpush1.msra.mxu0 0.0
    %403 = vmatprep.subr.mxu0 0.0
    %404 = vmatpush1.msra.mxu0 0.0
    %405 = vmatprep.subr.mxu0 0.0
    %406 = vmatpush1.msra.mxu0 0.0
    %407 = vmatprep.subr.mxu0 0.0
    %408 = vmatpush1.msra.mxu0 0.0
    %409 = vmatprep.subr.mxu0 0.0
    %410 = vmatpush1.msra.mxu0 0.0
    %411 = vmatprep.subr.mxu0 0.0
    %412 = vmatpush1.msra.mxu0 0.0
    %413 = vmatprep.subr.mxu0 0.0
    %414 = vmatpush1.msra.mxu0 0.0
    %415 = vmatprep.subr.mxu0 0.0
    %416 = vmatpush1.msra.mxu0 0.0
    %417 = vmatprep.subr.mxu0 0.0
    %418 = vmatpush1.msra.mxu0 0.0
    %419 = vmatprep.subr.mxu0 0.0
    %420 = vmatpush1.msra.mxu0 0.0
    %421 = vmatprep.subr.mxu0 0.0
    %422 = vmatpush1.msra.mxu0 0.0
    %423 = vmatprep.subr.mxu0 0.0
    %424 = vmatpush1.msra.mxu0 0.0
    %425 = vmatprep.subr.mxu0 0.0
    %426 = vmatpush1.msra.mxu0 0.0
    %427 = vmatprep.subr.mxu0 0.0
    %428 = vmatpush1.msra.mxu0 0.0
    %429 = vmatprep.subr.mxu0 0.0
    %430 = vmatpush1.msra.mxu0 0.0
    %431 = vmatprep.subr.mxu0 0.0
    %432 = vmatpush1.msra.mxu0 0.0
    %433 = vmatprep.subr.mxu0 0.0
    %434 = vmatpush1.msra.mxu0 0.0
    %435 = vmatprep.subr.mxu0 0.0
    %436 = vmatpush1.msra.mxu0 0.0
    %437 = vmatprep.subr.mxu0 0.0
    %438 = vmatpush1.msra.mxu0 0.0
    %439 = vmatprep.subr.mxu0 0.0
    %440 = vmatpush1.msra.mxu0 0.0
    %441 = vmatprep.subr.mxu0 0.0
    %442 = vmatpush1.msra.mxu0 0.0
    %443 = vmatprep.mubr.f32.mxu0 0.0
    %444 = vmatmul.mubr.f32.gmra.mrb[0].mxu0 %v130
    %v445 = vpop.f32.mrb[0].mxu0
    %v446 = vadd.f32 0.0, %v445
    %v447 = vpop.f32.mrb[0].mxu0
    %v448 = vadd.f32 0.0, %v447
    %449 = vmatprep.mubr.f32.mxu0 0.0
    %450 = vmatmul.mubr.f32.gmra.mrb[0].mxu0 %v133
    %v451 = vpop.f32.mrb[0].mxu0
    %v452 = vadd.f32 0.0, %v451
    %v453 = vpop.f32.mrb[0].mxu0
    %v454 = vadd.f32 0.0, %v453
    %455 = vmatprep.mubr.f32.mxu0 0.0
    %456 = vmatmul.mubr.f32.gmra.mrb[0].mxu0 %v136
    %v457 = vpop.f32.mrb[0].mxu0
    %v458 = vadd.f32 0.0, %v457
    %v459 = vpop.f32.mrb[0].mxu0
    %v460 = vadd.f32 0.0, %v459
    %461 = vmatprep.mubr.f32.mxu0 0.0
    %462 = vmatmul.mubr.f32.gmra.mrb[0].mxu0 %v139
    %v463 = vpop.f32.mrb[0].mxu0
    %v464 = vadd.f32 0.0, %v463
    %v465 = vpop.f32.mrb[0].mxu0
    %v466 = vadd.f32 0.0, %v465
    %467 = vmatprep.mubr.f32.mxu0 0.0
    %468 = vmatmul.mubr.f32.gmra.mrb[0].mxu0 %v142
    %v469 = vpop.f32.mrb[0].mxu0
    %v470 = vadd.f32 0.0, %v469
    %v471 = vpop.f32.mrb[0].mxu0
    %v472 = vadd.f32 0.0, %v471
    %473 = vmatprep.mubr.f32.mxu0 0.0
    %474 = vmatmul.mubr.f32.gmra.mrb[0].mxu0 %v145
    %v475 = vpop.f32.mrb[0].mxu0
    %v476 = vadd.f32 0.0, %v475
    %v477 = vpop.f32.mrb[0].mxu0
    %v478 = vadd.f32 0.0, %v477
    %479 = vmatprep.mubr.f32.mxu0 0.0
    %480 = vmatmul.mubr.f32.gmra.mrb[0].mxu0 %v148
    %v481 = vpop.f32.mrb[0].mxu0
    %v482 = vadd.f32 0.0, %v481
    %v483 = vpop.f32.mrb[0].mxu0
    %v484 = vadd.f32 0.0, %v483
    %485 = vmatprep.mubr.f32.mxu0 0.0
    %486 = vmatmul.mubr.f32.gmra.mrb[0].mxu0 %v151
    %v487 = vpop.f32.mrb[0].mxu0
    %v488 = vadd.f32 0.0, %v487
    %v489 = vpop.f32.mrb[0].mxu0
    %v490 = vadd.f32 0.0, %v489
    %491 = vdwg.mxu0
    %492 = vmatprep.subr.mxu0 %v71
    %493 = vmatpush1.msra.mxu0 %v70
    %494 = vmatprep.subr.mxu0 %v79
    %495 = vmatpush1.msra.mxu0 %v78
    %496 = vmatprep.subr.mxu0 %v87
    %497 = vmatpush1.msra.mxu0 %v86
    %498 = vmatprep.subr.mxu0 %v95
    %499 = vmatpush1.msra.mxu0 %v94
    %500 = vmatprep.subr.mxu0 %v103
    %501 = vmatpush1.msra.mxu0 %v102
    %502 = vmatprep.subr.mxu0 %v111
    %503 = vmatpush1.msra.mxu0 %v110
    %504 = vmatprep.subr.mxu0 %v119
    %505 = vmatpush1.msra.mxu0 %v118
    %506 = vmatprep.subr.mxu0 %v127
    %507 = vmatpush1.msra.mxu0 %v126
    %508 = vmatprep.subr.mxu0 0.0
    %509 = vmatpush1.msra.mxu0 0.0
    %510 = vmatprep.subr.mxu0 0.0
    %511 = vmatpush1.msra.mxu0 0.0
    %512 = vmatprep.subr.mxu0 0.0
    %513 = vmatpush1.msra.mxu0 0.0
    %514 = vmatprep.subr.mxu0 0.0
    %515 = vmatpush1.msra.mxu0 0.0
    %516 = vmatprep.subr.mxu0 0.0
    %517 = vmatpush1.msra.mxu0 0.0
    %518 = vmatprep.subr.mxu0 0.0
    %519 = vmatpush1.msra.mxu0 0.0
    %520 = vmatprep.subr.mxu0 0.0
    %521 = vmatpush1.msra.mxu0 0.0
    %522 = vmatprep.subr.mxu0 0.0
    %523 = vmatpush1.msra.mxu0 0.0
    %524 = vmatprep.subr.mxu0 0.0
    %525 = vmatpush1.msra.mxu0 0.0
    %526 = vmatprep.subr.mxu0 0.0
    %527 = vmatpush1.msra.mxu0 0.0
    %528 = vmatprep.subr.mxu0 0.0
    %529 = vmatpush1.msra.mxu0 0.0
    %530 = vmatprep.subr.mxu0 0.0
    %531 = vmatpush1.msra.mxu0 0.0
    %532 = vmatprep.subr.mxu0 0.0
    %533 = vmatpush1.msra.mxu0 0.0
    %534 = vmatprep.subr.mxu0 0.0
    %535 = vmatpush1.msra.mxu0 0.0
    %536 = vmatprep.subr.mxu0 0.0
    %537 = vmatpush1.msra.mxu0 0.0
    %538 = vmatprep.subr.mxu0 0.0
    %539 = vmatpush1.msra.mxu0 0.0
    %540 = vmatprep.subr.mxu0 0.0
    %541 = vmatpush1.msra.mxu0 0.0
    %542 = vmatprep.subr.mxu0 0.0
    %543 = vmatpush1.msra.mxu0 0.0
    %544 = vmatprep.subr.mxu0 0.0
    %545 = vmatpush1.msra.mxu0 0.0
    %546 = vmatprep.subr.mxu0 0.0
    %547 = vmatpush1.msra.mxu0 0.0
    %548 = vmatprep.subr.mxu0 0.0
    %549 = vmatpush1.msra.mxu0 0.0
    %550 = vmatprep.subr.mxu0 0.0
    %551 = vmatpush1.msra.mxu0 0.0
    %552 = vmatprep.subr.mxu0 0.0
    %553 = vmatpush1.msra.mxu0 0.0
    %554 = vmatprep.subr.mxu0 0.0
    %555 = vmatpush1.msra.mxu0 0.0
    %556 = vmatprep.mubr.f32.mxu0 0.0
    %557 = vmatmul.mubr.f32.gmra.mrb[0].mxu0 %v130
    %v558 = vpop.f32.mrb[0].mxu0
    %v559 = vadd.f32 0.0, %v558
    %v560 = vpop.f32.mrb[0].mxu0
    %v561 = vadd.f32 0.0, %v560
    %562 = vmatprep.mubr.f32.mxu0 0.0
    %563 = vmatmul.mubr.f32.gmra.mrb[0].mxu0 %v133
    %v564 = vpop.f32.mrb[0].mxu0
    %v565 = vadd.f32 0.0, %v564
    %v566 = vpop.f32.mrb[0].mxu0
    %v567 = vadd.f32 0.0, %v566
    %568 = vmatprep.mubr.f32.mxu0 0.0
    %569 = vmatmul.mubr.f32.gmra.mrb[0].mxu0 %v136
    %v570 = vpop.f32.mrb[0].mxu0
    %v571 = vadd.f32 0.0, %v570
    %v572 = vpop.f32.mrb[0].mxu0
    %v573 = vadd.f32 0.0, %v572
    %574 = vmatprep.mubr.f32.mxu0 0.0
    %575 = vmatmul.mubr.f32.gmra.mrb[0].mxu0 %v139
    %v576 = vpop.f32.mrb[0].mxu0
    %v577 = vadd.f32 0.0, %v576
    %v578 = vpop.f32.mrb[0].mxu0
    %v579 = vadd.f32 0.0, %v578
    %580 = vmatprep.mubr.f32.mxu0 0.0
    %581 = vmatmul.mubr.f32.gmra.mrb[0].mxu0 %v142
    %v582 = vpop.f32.mrb[0].mxu0
    %v583 = vadd.f32 0.0, %v582
    %v584 = vpop.f32.mrb[0].mxu0
    %v585 = vadd.f32 0.0, %v584
    %586 = vmatprep.mubr.f32.mxu0 0.0
    %587 = vmatmul.mubr.f32.gmra.mrb[0].mxu0 %v145
    %v588 = vpop.f32.mrb[0].mxu0
    %v589 = vadd.f32 0.0, %v588
    %v590 = vpop.f32.mrb[0].mxu0
    %v591 = vadd.f32 0.0, %v590
    %592 = vmatprep.mubr.f32.mxu0 0.0
    %593 = vmatmul.mubr.f32.gmra.mrb[0].mxu0 %v148
    %v594 = vpop.f32.mrb[0].mxu0
    %v595 = vadd.f32 0.0, %v594
    %v596 = vpop.f32.mrb[0].mxu0
    %v597 = vadd.f32 0.0, %v596
    %598 = vmatprep.mubr.f32.mxu0 0.0
    %599 = vmatmul.mubr.f32.gmra.mrb[0].mxu0 %v151
    %v600 = vpop.f32.mrb[0].mxu0
    %v601 = vadd.f32 0.0, %v600
    %v602 = vpop.f32.mrb[0].mxu0
    %v603 = vadd.f32 0.0, %v602
    %604 = vdwg.mxu0
    %v605 = vld [vmem:[#allocation7] sm:$0xff]
    %v606 = vld [vmem:[#allocation7 + $0x8] sm:$0xff]
    %v607 = vld [vmem:[#allocation7 + $0x10] sm:$0xff]
    %v608 = vld [vmem:[#allocation7 + $0x18] sm:$0xff]
    %v609 = vld [vmem:[#allocation7 + $0x20] sm:$0xff]
    %v610 = vld [vmem:[#allocation7 + $0x28] sm:$0xff]
    %v611 = vld [vmem:[#allocation7 + $0x30] sm:$0xff]
    %v612 = vld [vmem:[#allocation7 + $0x38] sm:$0xff]
    %v613 = vld [vmem:[#allocation7 + $0x40] sm:$0xff]
    %v614 = vld [vmem:[#allocation7 + $0x48] sm:$0xff]
    %v615 = vld [vmem:[#allocation7 + $0x50] sm:$0xff]
    %v616 = vld [vmem:[#allocation7 + $0x58] sm:$0xff]
    %v617 = vld [vmem:[#allocation7 + $0x60] sm:$0xff]
    %v618 = vld [vmem:[#allocation7 + $0x68] sm:$0xff]
    %v619 = vld [vmem:[#allocation7 + $0x70] sm:$0xff]
    %v620 = vld [vmem:[#allocation7 + $0x78] sm:$0xff]
    %v621 = vld [vmem:[#allocation7 + $0x80] sm:$0xff]
    %v622 = vld [vmem:[#allocation7 + $0x88] sm:$0xff]
    %v623 = vld [vmem:[#allocation7 + $0x90] sm:$0xff]
    %v624 = vld [vmem:[#allocation7 + $0x98] sm:$0xff]
    %v625 = vld [vmem:[#allocation7 + $0xa0] sm:$0xff]
    %v626 = vld [vmem:[#allocation7 + $0xa8] sm:$0xff]
    %v627 = vld [vmem:[#allocation7 + $0xb0] sm:$0xff]
    %v628 = vld [vmem:[#allocation7 + $0xb8] sm:$0xff]
    %v629 = vld [vmem:[#allocation7 + $0xc0] sm:$0xff]
    %v630 = vld [vmem:[#allocation7 + $0xc8] sm:$0xff]
    %v631 = vld [vmem:[#allocation7 + $0xd0] sm:$0xff]
    %v632 = vld [vmem:[#allocation7 + $0xd8] sm:$0xff]
    %v633 = vld [vmem:[#allocation7 + $0xe0] sm:$0xff]
    %v634 = vld [vmem:[#allocation7 + $0xe8] sm:$0xff]
    %v635 = vld [vmem:[#allocation7 + $0xf0] sm:$0xff]
    %v636 = vld [vmem:[#allocation7 + $0xf8] sm:$0xff]
    %v637 = vld [vmem:[#allocation7 + $0x100] sm:$0xff]
    %v638 = vld [vmem:[#allocation7 + $0x108] sm:$0xff]
    %v639 = vld [vmem:[#allocation7 + $0x110] sm:$0xff]
    %v640 = vld [vmem:[#allocation7 + $0x118] sm:$0xff]
    %v641 = vld [vmem:[#allocation7 + $0x120] sm:$0xff]
    %v642 = vld [vmem:[#allocation7 + $0x128] sm:$0xff]
    %v643 = vld [vmem:[#allocation7 + $0x130] sm:$0xff]
    %v644 = vld [vmem:[#allocation7 + $0x138] sm:$0xff]
    %v645 = vld [vmem:[#allocation7 + $0x140] sm:$0xff]
    %v646 = vld [vmem:[#allocation7 + $0x148] sm:$0xff]
    %v647 = vld [vmem:[#allocation7 + $0x150] sm:$0xff]
    %v648 = vld [vmem:[#allocation7 + $0x158] sm:$0xff]
    %v649 = vld [vmem:[#allocation7 + $0x160] sm:$0xff]
    %v650 = vld [vmem:[#allocation7 + $0x168] sm:$0xff]
    %v651 = vld [vmem:[#allocation7 + $0x170] sm:$0xff]
    %v652 = vld [vmem:[#allocation7 + $0x178] sm:$0xff]
    %v653 = vld [vmem:[#allocation7 + $0x180] sm:$0xff]
    %v654 = vld [vmem:[#allocation7 + $0x188] sm:$0xff]
    %v655 = vld [vmem:[#allocation7 + $0x190] sm:$0xff]
    %v656 = vld [vmem:[#allocation7 + $0x198] sm:$0xff]
    %v657 = vld [vmem:[#allocation7 + $0x1a0] sm:$0xff]
    %v658 = vld [vmem:[#allocation7 + $0x1a8] sm:$0xff]
    %v659 = vld [vmem:[#allocation7 + $0x1b0] sm:$0xff]
    %v660 = vld [vmem:[#allocation7 + $0x1b8] sm:$0xff]
    %v661 = vld [vmem:[#allocation7 + $0x1c0] sm:$0xff]
    %v662 = vld [vmem:[#allocation7 + $0x1c8] sm:$0xff]
    %v663 = vld [vmem:[#allocation7 + $0x1d0] sm:$0xff]
    %v664 = vld [vmem:[#allocation7 + $0x1d8] sm:$0xff]
    %v665 = vld [vmem:[#allocation7 + $0x1e0] sm:$0xff]
    %v666 = vld [vmem:[#allocation7 + $0x1e8] sm:$0xff]
    %v667 = vld [vmem:[#allocation7 + $0x1f0] sm:$0xff]
    %v668 = vld [vmem:[#allocation7 + $0x1f8] sm:$0xff]
    %v669 = vsub.f32 1.0, %v605
    %v670 = vsub.f32 1.0, %v606
    %v671 = vsub.f32 1.0, %v607
    %v672 = vsub.f32 1.0, %v608
    %v673 = vsub.f32 1.0, %v609
    %v674 = vsub.f32 1.0, %v610
    %v675 = vsub.f32 1.0, %v611
    %v676 = vsub.f32 1.0, %v612
    %v677 = vsub.f32 1.0, %v613
    %v678 = vsub.f32 1.0, %v614
    %v679 = vsub.f32 1.0, %v615
    %v680 = vsub.f32 1.0, %v616
    %v681 = vsub.f32 1.0, %v617
    %v682 = vsub.f32 1.0, %v618
    %v683 = vsub.f32 1.0, %v619
    %v684 = vsub.f32 1.0, %v620
    %v685 = vsub.f32 1.0, %v621
    %v686 = vsub.f32 1.0, %v622
    %v687 = vsub.f32 1.0, %v623
    %v688 = vsub.f32 1.0, %v624
    %v689 = vsub.f32 1.0, %v625
    %v690 = vsub.f32 1.0, %v626
    %v691 = vsub.f32 1.0, %v627
    %v692 = vsub.f32 1.0, %v628
    %v693 = vsub.f32 1.0, %v629
    %v694 = vsub.f32 1.0, %v630
    %v695 = vsub.f32 1.0, %v631
    %v696 = vsub.f32 1.0, %v632
    %v697 = vsub.f32 1.0, %v633
    %v698 = vsub.f32 1.0, %v634
    %v699 = vsub.f32 1.0, %v635
    %v700 = vsub.f32 1.0, %v636
    %v701 = vsub.f32 1.0, %v637
    %v702 = vsub.f32 1.0, %v638
    %v703 = vsub.f32 1.0, %v639
    %v704 = vsub.f32 1.0, %v640
    %v705 = vsub.f32 1.0, %v641
    %v706 = vsub.f32 1.0, %v642
    %v707 = vsub.f32 1.0, %v643
    %v708 = vsub.f32 1.0, %v644
    %v709 = vsub.f32 1.0, %v645
    %v710 = vsub.f32 1.0, %v646
    %v711 = vsub.f32 1.0, %v647
    %v712 = vsub.f32 1.0, %v648
    %v713 = vsub.f32 1.0, %v649
    %v714 = vsub.f32 1.0, %v650
    %v715 = vsub.f32 1.0, %v651
    %v716 = vsub.f32 1.0, %v652
    %v717 = vsub.f32 1.0, %v653
    %v718 = vsub.f32 1.0, %v654
    %v719 = vsub.f32 1.0, %v655
    %v720 = vsub.f32 1.0, %v656
    %v721 = vsub.f32 1.0, %v657
    %v722 = vsub.f32 1.0, %v658
    %v723 = vsub.f32 1.0, %v659
    %v724 = vsub.f32 1.0, %v660
    %v725 = vsub.f32 1.0, %v661
    %v726 = vsub.f32 1.0, %v662
    %v727 = vsub.f32 1.0, %v663
    %v728 = vsub.f32 1.0, %v664
    %v729 = vsub.f32 1.0, %v665
    %v730 = vsub.f32 1.0, %v666
    %v731 = vsub.f32 1.0, %v667
    %v732 = vsub.f32 1.0, %v668
    %v733 = vmul.f32 %v220, %v669
    %v734 = vmul.f32 %v222, %v670
    %v735 = vmul.f32 %v333, %v671
    %v736 = vmul.f32 %v335, %v672
    %v737 = vmul.f32 %v446, %v673
    %v738 = vmul.f32 %v448, %v674
    %v739 = vmul.f32 %v559, %v675
    %v740 = vmul.f32 %v561, %v676
    %v741 = vmul.f32 %v226, %v677
    %v742 = vmul.f32 %v228, %v678
    %v743 = vmul.f32 %v339, %v679
    %v744 = vmul.f32 %v341, %v680
    %v745 = vmul.f32 %v452, %v681
    %v746 = vmul.f32 %v454, %v682
    %v747 = vmul.f32 %v565, %v683
    %v748 = vmul.f32 %v567, %v684
    %v749 = vmul.f32 %v232, %v685
    %v750 = vmul.f32 %v234, %v686
    %v751 = vmul.f32 %v345, %v687
    %v752 = vmul.f32 %v347, %v688
    %v753 = vmul.f32 %v458, %v689
    %v754 = vmul.f32 %v460, %v690
    %v755 = vmul.f32 %v571, %v691
    %v756 = vmul.f32 %v573, %v692
    %v757 = vmul.f32 %v238, %v693
    %v758 = vmul.f32 %v240, %v694
    %v759 = vmul.f32 %v351, %v695
    %v760 = vmul.f32 %v353, %v696
    %v761 = vmul.f32 %v464, %v697
    %v762 = vmul.f32 %v466, %v698
    %v763 = vmul.f32 %v577, %v699
    %v764 = vmul.f32 %v579, %v700
    %v765 = vmul.f32 %v244, %v701
    %v766 = vmul.f32 %v246, %v702
    %v767 = vmul.f32 %v357, %v703
    %v768 = vmul.f32 %v359, %v704
    %v769 = vmul.f32 %v470, %v705
    %v770 = vmul.f32 %v472, %v706
    %v771 = vmul.f32 %v583, %v707
    %v772 = vmul.f32 %v585, %v708
    %v773 = vmul.f32 %v250, %v709
    %v774 = vmul.f32 %v252, %v710
    %v775 = vmul.f32 %v363, %v711
    %v776 = vmul.f32 %v365, %v712
    %v777 = vmul.f32 %v476, %v713
    %v778 = vmul.f32 %v478, %v714
    %v779 = vmul.f32 %v589, %v715
    %v780 = vmul.f32 %v591, %v716
    %v781 = vmul.f32 %v256, %v717
    %v782 = vmul.f32 %v258, %v718
    %v783 = vmul.f32 %v369, %v719
    %v784 = vmul.f32 %v371, %v720
    %v785 = vmul.f32 %v482, %v721
    %v786 = vmul.f32 %v484, %v722
    %v787 = vmul.f32 %v595, %v723
    %v788 = vmul.f32 %v597, %v724
    %v789 = vmul.f32 %v262, %v725
    %v790 = vmul.f32 %v264, %v726
    %v791 = vmul.f32 %v375, %v727
    %v792 = vmul.f32 %v377, %v728
    %v793 = vmul.f32 %v488, %v729
    %v794 = vmul.f32 %v490, %v730
    %v795 = vmul.f32 %v601, %v731
    %v796 = vmul.f32 %v603, %v732
    %v797 = vmul.f32 %v605, 1e+08
    %v798 = vmul.f32 %v606, 1e+08
    %v799 = vmul.f32 %v607, 1e+08
    %v800 = vmul.f32 %v608, 1e+08
    %v801 = vmul.f32 %v609, 1e+08
    %v802 = vmul.f32 %v610, 1e+08
    %v803 = vmul.f32 %v611, 1e+08
    %v804 = vmul.f32 %v612, 1e+08
    %v805 = vmul.f32 %v613, 1e+08
    %v806 = vmul.f32 %v614, 1e+08
    %v807 = vmul.f32 %v615, 1e+08
    %v808 = vmul.f32 %v616, 1e+08
    %v809 = vmul.f32 %v617, 1e+08
    %v810 = vmul.f32 %v618, 1e+08
    %v811 = vmul.f32 %v619, 1e+08
    %v812 = vmul.f32 %v620, 1e+08
    %v813 = vmul.f32 %v621, 1e+08
    %v814 = vmul.f32 %v622, 1e+08
    %v815 = vmul.f32 %v623, 1e+08
    %v816 = vmul.f32 %v624, 1e+08
    %v817 = vmul.f32 %v625, 1e+08
    %v818 = vmul.f32 %v626, 1e+08
    %v819 = vmul.f32 %v627, 1e+08
    %v820 = vmul.f32 %v628, 1e+08
    %v821 = vmul.f32 %v629, 1e+08
    %v822 = vmul.f32 %v630, 1e+08
    %v823 = vmul.f32 %v631, 1e+08
    %v824 = vmul.f32 %v632, 1e+08
    %v825 = vmul.f32 %v633, 1e+08
    %v826 = vmul.f32 %v634, 1e+08
    %v827 = vmul.f32 %v635, 1e+08
    %v828 = vmul.f32 %v636, 1e+08
    %v829 = vmul.f32 %v637, 1e+08
    %v830 = vmul.f32 %v638, 1e+08
    %v831 = vmul.f32 %v639, 1e+08
    %v832 = vmul.f32 %v640, 1e+08
    %v833 = vmul.f32 %v641, 1e+08
    %v834 = vmul.f32 %v642, 1e+08
    %v835 = vmul.f32 %v643, 1e+08
    %v836 = vmul.f32 %v644, 1e+08
    %v837 = vmul.f32 %v645, 1e+08
    %v838 = vmul.f32 %v646, 1e+08
    %v839 = vmul.f32 %v647, 1e+08
    %v840 = vmul.f32 %v648, 1e+08
    %v841 = vmul.f32 %v649, 1e+08
    %v842 = vmul.f32 %v650, 1e+08
    %v843 = vmul.f32 %v651, 1e+08
    %v844 = vmul.f32 %v652, 1e+08
    %v845 = vmul.f32 %v653, 1e+08
    %v846 = vmul.f32 %v654, 1e+08
    %v847 = vmul.f32 %v655, 1e+08
    %v848 = vmul.f32 %v656, 1e+08
    %v849 = vmul.f32 %v657, 1e+08
    %v850 = vmul.f32 %v658, 1e+08
    %v851 = vmul.f32 %v659, 1e+08
    %v852 = vmul.f32 %v660, 1e+08
    %v853 = vmul.f32 %v661, 1e+08
    %v854 = vmul.f32 %v662, 1e+08
    %v855 = vmul.f32 %v663, 1e+08
    %v856 = vmul.f32 %v664, 1e+08
    %v857 = vmul.f32 %v665, 1e+08
    %v858 = vmul.f32 %v666, 1e+08
    %v859 = vmul.f32 %v667, 1e+08
    %v860 = vmul.f32 %v668, 1e+08
    %v861 = vsub.f32 %v733, %v797
    %v862 = vsub.f32 %v734, %v798
    %v863 = vsub.f32 %v735, %v799
    %v864 = vsub.f32 %v736, %v800
    %v865 = vsub.f32 %v737, %v801
    %v866 = vsub.f32 %v738, %v802
    %v867 = vsub.f32 %v739, %v803
    %v868 = vsub.f32 %v740, %v804
    %v869 = vsub.f32 %v741, %v805
    %v870 = vsub.f32 %v742, %v806
    %v871 = vsub.f32 %v743, %v807
    %v872 = vsub.f32 %v744, %v808
    %v873 = vsub.f32 %v745, %v809
    %v874 = vsub.f32 %v746, %v810
    %v875 = vsub.f32 %v747, %v811
    %v876 = vsub.f32 %v748, %v812
    %v877 = vsub.f32 %v749, %v813
    %v878 = vsub.f32 %v750, %v814
    %v879 = vsub.f32 %v751, %v815
    %v880 = vsub.f32 %v752, %v816
    %v881 = vsub.f32 %v753, %v817
    %v882 = vsub.f32 %v754, %v818
    %v883 = vsub.f32 %v755, %v819
    %v884 = vsub.f32 %v756, %v820
    %v885 = vsub.f32 %v757, %v821
    %v886 = vsub.f32 %v758, %v822
    %v887 = vsub.f32 %v759, %v823
    %v888 = vsub.f32 %v760, %v824
    %v889 = vsub.f32 %v761, %v825
    %v890 = vsub.f32 %v762, %v826
    %v891 = vsub.f32 %v763, %v827
    %v892 = vsub.f32 %v764, %v828
    %v893 = vsub.f32 %v765, %v829
    %v894 = vsub.f32 %v766, %v830
    %v895 = vsub.f32 %v767, %v831
    %v896 = vsub.f32 %v768, %v832
    %v897 = vsub.f32 %v769, %v833
    %v898 = vsub.f32 %v770, %v834
    %v899 = vsub.f32 %v771, %v835
    %v900 = vsub.f32 %v772, %v836
    %v901 = vsub.f32 %v773, %v837
    %v902 = vsub.f32 %v774, %v838
    %v903 = vsub.f32 %v775, %v839
    %v904 = vsub.f32 %v776, %v840
    %v905 = vsub.f32 %v777, %v841
    %v906 = vsub.f32 %v778, %v842
    %v907 = vsub.f32 %v779, %v843
    %v908 = vsub.f32 %v780, %v844
    %v909 = vsub.f32 %v781, %v845
    %v910 = vsub.f32 %v782, %v846
    %v911 = vsub.f32 %v783, %v847
    %v912 = vsub.f32 %v784, %v848
    %v913 = vsub.f32 %v785, %v849
    %v914 = vsub.f32 %v786, %v850
    %v915 = vsub.f32 %v787, %v851
    %v916 = vsub.f32 %v788, %v852
    %v917 = vsub.f32 %v789, %v853
    %v918 = vsub.f32 %v790, %v854
    %v919 = vsub.f32 %v791, %v855
    %v920 = vsub.f32 %v792, %v856
    %v921 = vsub.f32 %v793, %v857
    %v922 = vsub.f32 %v794, %v858
    %v923 = vsub.f32 %v795, %v859
    %v924 = vsub.f32 %v796, %v860
    %925 = vst [vmem:[#allocation8] sm:$0xff] %v861
    %926 = vst [vmem:[#allocation8 + $0x8] sm:$0xff] %v862
    %927 = vst [vmem:[#allocation8 + $0x10] sm:$0xff] %v863
    %928 = vst [vmem:[#allocation8 + $0x18] sm:$0xff] %v864
    %929 = vst [vmem:[#allocation8 + $0x20] sm:$0xff] %v865
    %930 = vst [vmem:[#allocation8 + $0x28] sm:$0xff] %v866
    %931 = vst [vmem:[#allocation8 + $0x30] sm:$0xff] %v867
    %932 = vst [vmem:[#allocation8 + $0x38] sm:$0xff] %v868
    %933 = vst [vmem:[#allocation8 + $0x40] sm:$0xff] %v869
    %934 = vst [vmem:[#allocation8 + $0x48] sm:$0xff] %v870
    %935 = vst [vmem:[#allocation8 + $0x50] sm:$0xff] %v871
    %936 = vst [vmem:[#allocation8 + $0x58] sm:$0xff] %v872
    %937 = vst [vmem:[#allocation8 + $0x60] sm:$0xff] %v873
    %938 = vst [vmem:[#allocation8 + $0x68] sm:$0xff] %v874
    %939 = vst [vmem:[#allocation8 + $0x70] sm:$0xff] %v875
    %940 = vst [vmem:[#allocation8 + $0x78] sm:$0xff] %v876
    %941 = vst [vmem:[#allocation8 + $0x80] sm:$0xff] %v877
    %942 = vst [vmem:[#allocation8 + $0x88] sm:$0xff] %v878
    %943 = vst [vmem:[#allocation8 + $0x90] sm:$0xff] %v879
    %944 = vst [vmem:[#allocation8 + $0x98] sm:$0xff] %v880
    %945 = vst [vmem:[#allocation8 + $0xa0] sm:$0xff] %v881
    %946 = vst [vmem:[#allocation8 + $0xa8] sm:$0xff] %v882
    %947 = vst [vmem:[#allocation8 + $0xb0] sm:$0xff] %v883
    %948 = vst [vmem:[#allocation8 + $0xb8] sm:$0xff] %v884
    %949 = vst [vmem:[#allocation8 + $0xc0] sm:$0xff] %v885
    %950 = vst [vmem:[#allocation8 + $0xc8] sm:$0xff] %v886
    %951 = vst [vmem:[#allocation8 + $0xd0] sm:$0xff] %v887
    %952 = vst [vmem:[#allocation8 + $0xd8] sm:$0xff] %v888
    %953 = vst [vmem:[#allocation8 + $0xe0] sm:$0xff] %v889
    %954 = vst [vmem:[#allocation8 + $0xe8] sm:$0xff] %v890
    %955 = vst [vmem:[#allocation8 + $0xf0] sm:$0xff] %v891
    %956 = vst [vmem:[#allocation8 + $0xf8] sm:$0xff] %v892
    %957 = vst [vmem:[#allocation8 + $0x100] sm:$0xff] %v893
    %958 = vst [vmem:[#allocation8 + $0x108] sm:$0xff] %v894
    %959 = vst [vmem:[#allocation8 + $0x110] sm:$0xff] %v895
    %960 = vst [vmem:[#allocation8 + $0x118] sm:$0xff] %v896
    %961 = vst [vmem:[#allocation8 + $0x120] sm:$0xff] %v897
    %962 = vst [vmem:[#allocation8 + $0x128] sm:$0xff] %v898
    %963 = vst [vmem:[#allocation8 + $0x130] sm:$0xff] %v899
    %964 = vst [vmem:[#allocation8 + $0x138] sm:$0xff] %v900
    %965 = vst [vmem:[#allocation8 + $0x140] sm:$0xff] %v901
    %966 = vst [vmem:[#allocation8 + $0x148] sm:$0xff] %v902
    %967 = vst [vmem:[#allocation8 + $0x150] sm:$0xff] %v903
    %968 = vst [vmem:[#allocation8 + $0x158] sm:$0xff] %v904
    %969 = vst [vmem:[#allocation8 + $0x160] sm:$0xff] %v905
    %970 = vst [vmem:[#allocation8 + $0x168] sm:$0xff] %v906
    %971 = vst [vmem:[#allocation8 + $0x170] sm:$0xff] %v907
    %972 = vst [vmem:[#allocation8 + $0x178] sm:$0xff] %v908
    %973 = vst [vmem:[#allocation8 + $0x180] sm:$0xff] %v909
    %974 = vst [vmem:[#allocation8 + $0x188] sm:$0xff] %v910
    %975 = vst [vmem:[#allocation8 + $0x190] sm:$0xff] %v911
    %976 = vst [vmem:[#allocation8 + $0x198] sm:$0xff] %v912
    %977 = vst [vmem:[#allocation8 + $0x1a0] sm:$0xff] %v913
    %978 = vst [vmem:[#allocation8 + $0x1a8] sm:$0xff] %v914
    %979 = vst [vmem:[#allocation8 + $0x1b0] sm:$0xff] %v915
    %980 = vst [vmem:[#allocation8 + $0x1b8] sm:$0xff] %v916
    %981 = vst [vmem:[#allocation8 + $0x1c0] sm:$0xff] %v917
    %982 = vst [vmem:[#allocation8 + $0x1c8] sm:$0xff] %v918
    %983 = vst [vmem:[#allocation8 + $0x1d0] sm:$0xff] %v919
    %984 = vst [vmem:[#allocation8 + $0x1d8] sm:$0xff] %v920
    %985 = vst [vmem:[#allocation8 + $0x1e0] sm:$0xff] %v921
    %986 = vst [vmem:[#allocation8 + $0x1e8] sm:$0xff] %v922
    %987 = vst [vmem:[#allocation8 + $0x1f0] sm:$0xff] %v923
    %988 = vst [vmem:[#allocation8 + $0x1f8] sm:$0xff] %v924
    // Predicated region
    $region26: #{tpu_custom_call.1} parent=1 // pred_check
      _
    $region27: #{tpu_custom_call.1} parent=1 // pred_check_branch
      %990 = sbr.rel (0) target = $region29
    $region28: #{tpu_custom_call.1} parent=1 // pred_region
      %s992 = ssub.s32 8192, 5120
      %993 = vsyncadd [#allocation4], %s992
      %s994 = sshll.u32 [#allocation8], 4
      %s995 = int_to_ptr.vmem [resolvable:$true] %s994
      %1000 = dma.vmem_to_hbm [thread:$0]  %s995, 5120, %s3, [#allocation4], 1024, 1024, 64
    $region29: #{tpu_custom_call.1} parent=1 // pred_fallthru
      _
    // Predicated region
    $region30: #{tpu_custom_call.1} parent=1 // pred_check
      _
    $region31: #{tpu_custom_call.1} parent=1 // pred_check_branch
      %1002 = sbr.rel (0) target = $region33
    $region32: #{tpu_custom_call.1} parent=1 // pred_region
      %1003 = dma.done [#allocation4], 8192
    $region33: #{tpu_custom_call.1} parent=1 // pred_fallthru
      _
    %1004 = vsyncpa [#allocation3], 1
    %1005 = vsyncpa [#allocation6], 1
    %1006 = vsyncpa [#allocation4], 1

</llo_original>
